<compile_context>
chip_gen: v6e
topology: v6e:2x2x1
jax: 0.10.0
libtpu: 0.0.40
codegen_flags: <defaults>
</compile_context>

<pallas_src>
import jax
import jax.numpy as jnp
from jax.experimental import pallas as pl
from jax.experimental.pallas import tpu as pltpu


def _mixup_kernel(w_ref, orig_ref, gen_ref, out_ref):
    # w_ref lives in SMEM: a single f32 scalar mix weight.
    w = w_ref[0]
    a = orig_ref[...].astype(jnp.float32)
    b = gen_ref[...].astype(jnp.float32)
    out_ref[...] = (w * a + (1.0 - w) * b).astype(out_ref.dtype)


def _vmem_capacity_bytes() -> int:
    """Physical VMEM per TensorCore; falls back to the most restrictive gen (v7x)."""
    try:
        return int(pltpu.get_tpu_info().vmem_capacity_bytes)
    except Exception:
        return 64 * 1024 * 1024


_LANE_CANDIDATES = (4096, 2048, 1024, 512, 256, 128)


def mixup(original: jax.Array, generated: jax.Array, weight: jax.Array) -> jax.Array:
    """Elementwise mix: weight * original + (1 - weight) * generated."""
    assert original.shape == generated.shape
    assert original.dtype == generated.dtype

    shape = original.shape
    dtype = original.dtype
    total = original.size
    itemsize = jnp.dtype(dtype).itemsize

    w_smem = weight.reshape((1,)).astype(jnp.float32)

    # --- VMEM budget / tile sizing (per generation) --------------------------
    vmem_cap = _vmem_capacity_bytes()                      # 64 MiB (v7x) / 128 MiB (v5e, v6e)
    budget = min(vmem_cap - 16 * 2**20, 48 * 2**20)        # double-buffered footprint cap
    tile_bytes = max(1 << 20, min(budget // 6, 4 * 2**20))  # per-operand per-buffer tile
    vmem_limit = int(min(vmem_cap - 8 * 2**20, 6 * tile_bytes + 8 * 2**20))

    compiler_params = pltpu.CompilerParams(
        dimension_semantics=("parallel",),
        vmem_limit_bytes=vmem_limit,
    )

    lanes = next((c for c in _LANE_CANDIDATES if total % c == 0), None)

    if lanes is None:
        # ---- Fallback: element count not a multiple of 128. -----------------
        # Full-extent blocks over the original N-D shape (always layout-legal),
        # gridded over the leading axis. No host-side pad or output slice.
        if original.ndim < 2:
            a_nd = original.reshape(1, max(total, 1))
            b_nd = generated.reshape(1, max(total, 1))
        else:
            a_nd = original
            b_nd = generated
        nd_shape = a_nd.shape
        ndim = len(nd_shape)
        block = (1,) + nd_shape[1:]
        idx = lambda i: (i,) + (0,) * (ndim - 1)
        # TODO(synk): if a single leading-axis slice of a non-128-divisible
        # array ever exceeds VMEM, this fallback would need further tiling.
        out_nd = pl.pallas_call(
            _mixup_kernel,
            out_shape=jax.ShapeDtypeStruct(nd_shape, dtype),
            grid=(nd_shape[0],),
            in_specs=[
                pl.BlockSpec(memory_space=pltpu.SMEM),  # scalar weight (f32)
                pl.BlockSpec(block, idx),               # original slice
                pl.BlockSpec(block, idx),               # generated slice
            ],
            out_specs=pl.BlockSpec(block, idx),
            compiler_params=compiler_params,
        )(w_smem, a_nd, b_nd)
        return out_nd.reshape(shape)

    # ---- Fast path: lane-dense 2-D slab, no padding needed -------------------
    rows = total // lanes
    a2d = original.reshape(rows, lanes)
    b2d = generated.reshape(rows, lanes)

    # Sublane packing: 8 rows for 32-bit, 16 for 16-bit, 32 for 8-bit dtypes.
    sublane = 8 * max(1, 4 // max(1, itemsize))

    # Row tile from the byte budget, rounded to whole sublanes.
    tile_r = max(sublane, (tile_bytes // (lanes * itemsize)) // sublane * sublane)

    # Guarantee >= 4 grid steps (>= 2 per TensorCore on v7x megacore) whenever
    # the row count allows it, so both cores get work and DMA overlaps compute.
    if rows >= 4 * sublane:
        tile_r = min(tile_r, max(sublane, (rows // 4) // sublane * sublane))
    elif rows >= 2 * sublane:
        tile_r = min(tile_r, max(sublane, (rows // 2) // sublane * sublane))
    tile_r = min(tile_r, rows)

    # Prefer a tile_r that divides rows exactly (all blocks full-shape ->
    # unmasked stores, fully contiguous DMAs). If no sublane-aligned divisor
    # exists, keep the ragged last block (correct via Pallas edge masking).
    if rows % tile_r != 0:
        t = tile_r
        while t > sublane and rows % t != 0:
            t -= sublane
        if rows % t == 0:
            tile_r = t

    grid_r = pl.cdiv(rows, tile_r)

    out2d = pl.pallas_call(
        _mixup_kernel,
        out_shape=jax.ShapeDtypeStruct((rows, lanes), dtype),
        grid=(grid_r,),
        in_specs=[
            pl.BlockSpec(memory_space=pltpu.SMEM),            # scalar weight (f32)
            pl.BlockSpec((tile_r, lanes), lambda i: (i, 0)),  # original tile
            pl.BlockSpec((tile_r, lanes), lambda i: (i, 0)),  # generated tile
        ],
        out_specs=pl.BlockSpec((tile_r, lanes), lambda i: (i, 0)),
        compiler_params=compiler_params,
    )(w_smem, a2d, b2d)

    return out2d.reshape(shape)


def _check(shape, key, dtype=jnp.float32, atol=1e-6, rtol=1e-6):
    k_orig, k_gen, k_w = jax.random.split(key, 3)
    original = jax.random.normal(k_orig, shape).astype(dtype)
    generated = jax.random.normal(k_gen, shape).astype(dtype)
    # Beta(1.0, 1.0) == Uniform(0, 1); deterministic given the key.
    weight = jax.random.beta(k_w, 1.0, 1.0, dtype=jnp.float32)

    mixed = jax.block_until_ready(mixup(original, generated, weight))

    w32 = weight.astype(jnp.float32)
    ref = (w32 * original.astype(jnp.float32)
           + (1.0 - w32) * generated.astype(jnp.float32)).astype(dtype)
    assert mixed.shape == shape
    assert mixed.dtype == dtype
    assert jnp.allclose(mixed.astype(jnp.float32), ref.astype(jnp.float32),
                        atol=atol, rtol=rtol)


if __name__ == "__main__":
    key = jax.random.PRNGKey(0)
    k0, k1, k2, k3 = jax.random.split(key, 4)

    # Primary small NCHW case: batch=2, channels=4, spatial=16x16 (fast path).
    _check((2, 4, 16, 16), k0)

    # Non-128-divisible case: exercises the pad-free N-D fallback path.
    _check((2, 3, 7, 5), k1)

    # Larger case: exercises the multi-step tiled grid (grid_r >= 4).
    _check((8, 16, 64, 64), k2)

    # bf16 case: exercises sublane=16 packing and the f32-compute/cast path.
    _check((2, 4, 16, 16), k3, dtype=jnp.bfloat16, atol=1e-2, rtol=1e-2)

    print("KERNEL_OK")
</pallas_src>

<mosaic_0001>
module attributes {stable_mosaic.version = 11 : i64} {
  func.func @_mixup_kernel(%arg0: i32, %arg1: memref<1xf32, #tpu.memory_space<smem>>, %arg2: memref<1x2048xf32, #tpu.memory_space<vmem>>, %arg3: memref<1x2048xf32, #tpu.memory_space<vmem>>, %arg4: memref<1x2048xf32, #tpu.memory_space<vmem>>) attributes {dimension_semantics = [#tpu.dimension_semantics<parallel>], iteration_bounds = array<i64: 1>, scalar_prefetch = 0 : i64, scratch_operands = 0 : i64, tpu.core_type = #tpu.core_type<tc>, window_params = [{transform_indices = @transform_0, window_bounds = array<i64: 1>}, {transform_indices = @transform_1, window_bounds = array<i64: 1, 2048>}, {transform_indices = @transform_2, window_bounds = array<i64: 1, 2048>}, {transform_indices = @transform_3, window_bounds = array<i64: 1, 2048>}]} {
    %c0 = arith.constant 0 : index
    %0 = memref.load %arg1[%c0] : memref<1xf32, #tpu.memory_space<smem>>
    %c0_0 = arith.constant 0 : index
    %c0_1 = arith.constant 0 : index
    %1 = vector.load %arg2[%c0_0, %c0_1] : memref<1x2048xf32, #tpu.memory_space<vmem>>, vector<1x2048xf32>
    %c0_2 = arith.constant 0 : index
    %c0_3 = arith.constant 0 : index
    %2 = vector.load %arg3[%c0_2, %c0_3] : memref<1x2048xf32, #tpu.memory_space<vmem>>, vector<1x2048xf32>
    %3 = vector.broadcast %0 : f32 to vector<1x2048xf32>
    %4 = arith.mulf %3, %1 : vector<1x2048xf32>
    %cst = arith.constant 1.000000e+00 : f32
    %5 = arith.subf %cst, %0 : f32
    %6 = vector.broadcast %5 : f32 to vector<1x2048xf32>
    %7 = arith.mulf %6, %2 : vector<1x2048xf32>
    %8 = arith.addf %4, %7 : vector<1x2048xf32>
    %c0_4 = arith.constant 0 : index
    %c0_5 = arith.constant 0 : index
    %9 = vector.load %arg4[%c0_4, %c0_5] : memref<1x2048xf32, #tpu.memory_space<vmem>>, vector<1x2048xf32>
    tpu.vector_store %arg4[%c0_4, %c0_5], %8 {strides = array<i32>} : memref<1x2048xf32, #tpu.memory_space<vmem>>, vector<1x2048xf32>,
    return
  }
  func.func @transform_0(%arg0: i32) -> i32 {
    %c0_i32 = arith.constant 0 : i32
    %c0_i32_0 = arith.constant 0 : i32
    return %c0_i32 : i32
  }
  func.func @transform_1(%arg0: i32) -> (i32, i32) {
    %c0_i32 = arith.constant 0 : i32
    %c0_i32_0 = arith.constant 0 : i32
    return %arg0, %c0_i32 : i32, i32
  }
  func.func @transform_2(%arg0: i32) -> (i32, i32) {
    %c0_i32 = arith.constant 0 : i32
    %c0_i32_0 = arith.constant 0 : i32
    return %arg0, %c0_i32 : i32, i32
  }
  func.func @transform_3(%arg0: i32) -> (i32, i32) {
    %c0_i32 = arith.constant 0 : i32
    %c0_i32_0 = arith.constant 0 : i32
    return %arg0, %c0_i32 : i32, i32
  }
}

</mosaic_0001>

<llo_original>
// kernel: tpu_custom_call.1
$region0: #{tpu_custom_call.1}
  #allocation0 [shape = 'u32[]', space=smem, size = 0x4, offset = 0x4, fixed_abs, tag = 'smem constant byte address 0x4 - core index']
  #allocation1 [shape = 'u32[144,128]{1,0:T(1,128)}', space=vmem, size = 0x12000, scoped, tag = 'internal scratch']
  #allocation2 [shape = 'f32[1]{0:T(128)S(6)}', space=smem, size = 0x200, scoped, tag = 'scoped memory for tpu_custom_call.1']
  %s0 = inlined_call_operand.<no memory space> [shape: f32[1], index: 0, kind: input, shape index: {}]
  %s1 = inlined_call_operand.hbm [shape: f32[1,2048], index: 1, kind: input, shape index: {}]
  %s2 = inlined_call_operand.hbm [shape: f32[1,2048], index: 2, kind: input, shape index: {}]
  %s3 = inlined_call_operand.hbm [shape: f32[1,2048], index: 3, kind: output, shape index: {}]
  %s4 = sld [smem:[#allocation0]]
  $region30: #{tpu_custom_call.1} parent=0
    _
  %s6 = ssub.s32 1, %s4
  %s7 = scalar_select 0, %s6, %s4
  %8 = sst [smem:[#allocation2]] %s0
  $region1: #{tpu_custom_call.1} parent=0
    #allocation3 [shape = 'u8[8192]{0}', space=vmem, size = 0x2000, scoped, tag = 'input window, operand 1, single buffered']
    #allocation4 [shape = 's32[1]{0}', space=sflag, size = 0x4, scoped, tag = 'scoped memory for tpu_custom_call.1']
    #allocation5 [shape = 's32[1]{0}', space=sflag, size = 0x4, scoped, tag = 'scoped memory for tpu_custom_call.1']
    #allocation6 [shape = 'u8[8192]{0}', space=vmem, size = 0x2000, scoped, tag = 'input window, operand 2, single buffered']
    #allocation7 [shape = 's32[1]{0}', space=sflag, size = 0x4, scoped, tag = 'scoped memory for tpu_custom_call.1']
    #allocation8 [shape = 'u8[8192]{0}', space=vmem, size = 0x2000, scoped, tag = 'output window, operand 0, single buffered']
    %9 = vsyncpa [#allocation4], 0
    %10 = vsyncpa [#allocation7], 0
    %11 = vsyncpa [#allocation5], 0
    // Predicated region
    $region2: #{tpu_custom_call.1} parent=1 // pred_check
      _
    $region3: #{tpu_custom_call.1} parent=1 // pred_check_branch
      %13 = sbr.rel (0) target = $region5
    $region4: #{tpu_custom_call.1} parent=1 // pred_region
      _
    $region5: #{tpu_custom_call.1} parent=1 // pred_fallthru
      _
    // Predicated region
    $region6: #{tpu_custom_call.1} parent=1 // pred_check
      _
    $region7: #{tpu_custom_call.1} parent=1 // pred_check_branch
      %15 = sbr.rel (0) target = $region9
    $region8: #{tpu_custom_call.1} parent=1 // pred_region
      %s17 = ssub.s32 256, 256
      %18 = vsyncadd [#allocation4], %s17
      %s20 = sshll.u32 [#allocation3], 4
      %s21 = int_to_ptr.vmem [resolvable:$true] %s20
      %23 = dma.hbm_to_vmem [thread:$0]  %s1, 256, %s21, [#allocation4]
    $region9: #{tpu_custom_call.1} parent=1 // pred_fallthru
      _
    // Predicated region
    $region10: #{tpu_custom_call.1} parent=1 // pred_check
      _
    $region11: #{tpu_custom_call.1} parent=1 // pred_check_branch
      %25 = sbr.rel (0) target = $region13
    $region12: #{tpu_custom_call.1} parent=1 // pred_region
      %s27 = ssub.s32 256, 256
      %28 = vsyncadd [#allocation7], %s27
      %s30 = sshll.u32 [#allocation6], 4
      %s31 = int_to_ptr.vmem [resolvable:$true] %s30
      %33 = dma.hbm_to_vmem [thread:$0]  %s2, 256, %s31, [#allocation7]
    $region13: #{tpu_custom_call.1} parent=1 // pred_fallthru
      _
    // Predicated region
    $region14: #{tpu_custom_call.1} parent=1 // pred_check
      _
    $region15: #{tpu_custom_call.1} parent=1 // pred_check_branch
      %35 = sbr.rel (0) target = $region17
    $region16: #{tpu_custom_call.1} parent=1 // pred_region
      %36 = dma.done [#allocation4], 256
    $region17: #{tpu_custom_call.1} parent=1 // pred_fallthru
      _
    // Predicated region
    $region18: #{tpu_custom_call.1} parent=1 // pred_check
      _
    $region19: #{tpu_custom_call.1} parent=1 // pred_check_branch
      %38 = sbr.rel (0) target = $region21
    $region20: #{tpu_custom_call.1} parent=1 // pred_region
      %39 = dma.done [#allocation7], 256
    $region21: #{tpu_custom_call.1} parent=1 // pred_fallthru
      _
    %s40 = sld [smem:[#allocation2]]
    %v41 = vld [vmem:[#allocation3] sm:$0xff]
    %v42 = vld [vmem:[#allocation3 + $0x8] sm:$0xff]
    %v43 = vld [vmem:[#allocation6] sm:$0xff]
    %v44 = vld [vmem:[#allocation6 + $0x8] sm:$0xff]
    %v45 = vstv %s40
    %v46 = vmul.f32 %v45, %v41
    %v47 = vmul.f32 %v45, %v42
    %s48 = ssub.f32 1.0, %s40
    %v49 = vstv %s48
    %v50 = vmul.f32 %v49, %v43
    %v51 = vmul.f32 %v49, %v44
    %v52 = vadd.f32 %v46, %v50
    %v53 = vadd.f32 %v47, %v51
    %54 = vst [vmem:[#allocation8] sm:$0xff] %v52
    %55 = vst [vmem:[#allocation8 + $0x8] sm:$0xff] %v53
    // Predicated region
    $region22: #{tpu_custom_call.1} parent=1 // pred_check
      _
    $region23: #{tpu_custom_call.1} parent=1 // pred_check_branch
      %57 = sbr.rel (0) target = $region25
    $region24: #{tpu_custom_call.1} parent=1 // pred_region
      %s59 = ssub.s32 256, 256
      %60 = vsyncadd [#allocation5], %s59
      %s62 = sshll.u32 [#allocation8], 4
      %s63 = int_to_ptr.vmem [resolvable:$true] %s62
      %65 = dma.vmem_to_hbm [thread:$0]  %s63, 256, %s3, [#allocation5]
    $region25: #{tpu_custom_call.1} parent=1 // pred_fallthru
      _
    // Predicated region
    $region26: #{tpu_custom_call.1} parent=1 // pred_check
      _
    $region27: #{tpu_custom_call.1} parent=1 // pred_check_branch
      %67 = sbr.rel (0) target = $region29
    $region28: #{tpu_custom_call.1} parent=1 // pred_region
      %68 = dma.done [#allocation5], 256
    $region29: #{tpu_custom_call.1} parent=1 // pred_fallthru
      _
    %69 = vsyncpa [#allocation4], 1
    %70 = vsyncpa [#allocation7], 1
    %71 = vsyncpa [#allocation5], 1

</llo_original>
